<compile_context>
chip_gen: v6e
topology: v6e:2x2x1
jax: 0.10.0
libtpu: 0.0.40
codegen_flags: <defaults>
</compile_context>

<pallas_src>
import jax
import jax.numpy as jnp
import numpy as np
from jax.experimental import pallas as pl
from jax.experimental.pallas import tpu as pltpu

PAD_IDX = 0  # stand-in for SRC_STOI['<PAD>']

# ---------------- logical model dims (small, consistent with the module) ----------------
B = 4          # batch
V = 32         # output_dim (target vocab)
E = 32         # emb_dim
H = 32         # hid_dim
L = 2          # n_layers

# ---------------- packed-layout constants ----------------
V_P = 128              # vocab padded to one full vreg lane width (unmasked logits store)
G4 = 4 * H             # fused gate width (r | z | gi_n | gh_n) == 128 lanes
IN = E + H             # fused [x|h] contraction dim per layer
FC_OFF = L * IN        # row offset of W_fc inside the weight slab
EMB_OFF = FC_OFF + H   # row offset of the embedding table inside the weight slab
W_ROWS = EMB_OFF + V   # total slab rows (= 192)

assert E == H, "packed [x|h] layout assumes emb_dim == hid_dim"
assert G4 == V_P, "gate width and padded vocab width must both be 128 lanes"


# ---------------- Pallas kernel: one GRU decode step (embed -> 2xGRU -> fc) ----------------
def decoder_kernel(tok_ref, h_ref, w_ref, b_ref, out_ref):
    # In-kernel embedding lookup: one-hot(tokens) @ emb_table on the MXU (padding row is 0).
    tok = tok_ref[...]                                                    # [B, 1] int32
    onehot = (jax.lax.broadcasted_iota(jnp.int32, (B, V), 1) == tok).astype(jnp.bfloat16)
    x_full = jnp.dot(onehot, w_ref[EMB_OFF:EMB_OFF + V, :],
                     preferred_element_type=jnp.float32)                  # [B, 128]
    x = x_full[:, :E]                                                     # [B, E] f32 (dropout = identity)

    hs = []
    for l in range(L):                                                    # L = 2, static unroll
        h = h_ref[l]                                                      # [B, H] f32
        xh = jnp.concatenate([x, h], axis=1).astype(jnp.bfloat16)         # [B, E+H]
        g = jnp.dot(xh, w_ref[l * IN:(l + 1) * IN, :],
                    preferred_element_type=jnp.float32) + b_ref[l]        # [B, 4H] f32
        r = jax.nn.sigmoid(g[:, 0:H])
        z = jax.nn.sigmoid(g[:, H:2 * H])
        n = jnp.tanh(g[:, 2 * H:3 * H] + r * g[:, 3 * H:4 * H])           # b_hh_n stays inside r*(.)
        h_new = (1.0 - z) * n + z * h                                     # [B, H] f32
        hs.append(h_new)
        x = h_new                                                         # next layer (dropout = identity)

    # Lane-dense output projection (V padded to 128).
    logits = jnp.dot(x.astype(jnp.bfloat16), w_ref[FC_OFF:FC_OFF + H, :],
                     preferred_element_type=jnp.float32) + b_ref[L]       # [B, 128]

    out_ref[0] = logits
    out_ref[1] = jnp.concatenate(
        hs + [jnp.zeros((B, V_P - L * H), jnp.float32)], axis=1)          # [B, 128] packed hidden


# ---------------- one-time parameter packing (hoisted out of the per-step path) ----------------
def pack_decoder_params(emb_table, w_ih, w_hh, b_ih, b_hh, w_fc, b_fc):
    """Run once. w_ih:[L,3,E,H], w_hh:[L,3,H,H] (gate order r,z,n, pre-transposed for x@W)."""
    f32 = jnp.float32
    # Fused [x|h] weight per layer: [IN, 4H].
    w_cat = jnp.zeros((L, IN, G4), f32)
    w_cat = w_cat.at[:, :E, 0:H].set(w_ih[:, 0])            # r  (input half)
    w_cat = w_cat.at[:, E:, 0:H].set(w_hh[:, 0])            # r  (hidden half)
    w_cat = w_cat.at[:, :E, H:2 * H].set(w_ih[:, 1])        # z  (input half)
    w_cat = w_cat.at[:, E:, H:2 * H].set(w_hh[:, 1])        # z  (hidden half)
    w_cat = w_cat.at[:, :E, 2 * H:3 * H].set(w_ih[:, 2])    # gi_n (input half only)
    w_cat = w_cat.at[:, E:, 3 * H:4 * H].set(w_hh[:, 2])    # gh_n (hidden half only)

    wfc_p = jnp.zeros((H, V_P), f32).at[:, :V].set(w_fc)
    emb_p = jnp.zeros((V, V_P), f32).at[:, :E].set(emb_table)
    w_slab = jnp.concatenate([w_cat.reshape(L * IN, G4), wfc_p, emb_p],
                             axis=0).astype(jnp.bfloat16)   # [192, 128] bf16

    b_all = jnp.zeros((L + 1, 1, G4), f32)
    b_all = b_all.at[:L, 0, 0:H].set(b_ih[:, 0] + b_hh[:, 0])        # r  (safe to pre-sum)
    b_all = b_all.at[:L, 0, H:2 * H].set(b_ih[:, 1] + b_hh[:, 1])    # z  (safe to pre-sum)
    b_all = b_all.at[:L, 0, 2 * H:3 * H].set(b_ih[:, 2])             # b_ih_n
    b_all = b_all.at[:L, 0, 3 * H:4 * H].set(b_hh[:, 2])             # b_hh_n (inside r*(.))
    b_all = b_all.at[L, 0, :V].set(b_fc.reshape(-1))                 # fc bias, padded to 128
    return w_slab, b_all


# ---------------- per-step wrapper (no weight prep, no padding ops) ----------------
@jax.jit
def decoder_step(tokens, hidden, w_slab, b_all):
    """tokens: [B] int32, hidden: [L, B, H] f32 -> (logits [B, V], new hidden [L, B, H])."""
    vmem = pl.BlockSpec(memory_space=pltpu.MemorySpace.VMEM)
    out = pl.pallas_call(
        decoder_kernel,
        out_shape=jax.ShapeDtypeStruct((2, B, V_P), jnp.float32),
        in_specs=[vmem, vmem, vmem, vmem],
        out_specs=vmem,
    )(tokens.reshape(B, 1).astype(jnp.int32), hidden.astype(jnp.float32), w_slab, b_all)
    logits = out[0, :, :V]
    new_hidden = jnp.transpose(out[1, :, :L * H].reshape(B, L, H), (1, 0, 2))
    return logits, new_hidden


# ---------------- pure-JAX reference (mirrors PyTorch GRU math, full f32) ----------------
def decoder_ref(emb, hidden, w_ih, w_hh, b_ih, b_hh, w_fc, b_fc):
    x = emb
    hs = []
    for l in range(L):
        h = hidden[l]
        r = jax.nn.sigmoid(x @ w_ih[l, 0] + b_ih[l, 0] + h @ w_hh[l, 0] + b_hh[l, 0])
        z = jax.nn.sigmoid(x @ w_ih[l, 1] + b_ih[l, 1] + h @ w_hh[l, 1] + b_hh[l, 1])
        n = jnp.tanh(x @ w_ih[l, 2] + b_ih[l, 2] + r * (h @ w_hh[l, 2] + b_hh[l, 2]))
        h_new = (1.0 - z) * n + z * h
        hs.append(h_new)
        x = h_new
    return x @ w_fc + b_fc, jnp.stack(hs, axis=0)


if __name__ == "__main__":
    key = jax.random.PRNGKey(0)
    keys = jax.random.split(key, 10)
    scale = 1.0 / np.sqrt(H)

    # Parameters (deterministic init; gate order r, z, n, matching PyTorch GRU layout).
    emb_table = jax.random.normal(keys[0], (V, E), jnp.float32) * 0.1
    emb_table = emb_table.at[PAD_IDX].set(0.0)                      # padding_idx row = 0
    w_ih = jax.random.uniform(keys[1], (L, 3, E, H), jnp.float32, -scale, scale)
    w_hh = jax.random.uniform(keys[2], (L, 3, H, H), jnp.float32, -scale, scale)
    b_ih = jax.random.uniform(keys[3], (L, 3, H), jnp.float32, -scale, scale)
    b_hh = jax.random.uniform(keys[4], (L, 3, H), jnp.float32, -scale, scale)
    w_fc = jax.random.uniform(keys[5], (H, V), jnp.float32, -scale, scale)
    b_fc = jax.random.uniform(keys[6], (1, V), jnp.float32, -scale, scale)

    # Inputs: one token per batch element (PyTorch does inp.unsqueeze(1)) + multi-layer hidden.
    inp = jax.random.randint(keys[7], (B,), 0, V, dtype=jnp.int32)
    hidden = jax.random.normal(keys[8], (L, B, H), jnp.float32)

    # One-time packing (NOT in the per-step path).
    w_slab, b_all = pack_decoder_params(emb_table, w_ih, w_hh, b_ih, b_hh, w_fc, b_fc)

    logits, new_hidden = decoder_step(inp, hidden, w_slab, b_all)
    jax.block_until_ready((logits, new_hidden))

    emb = jnp.take(emb_table, inp, axis=0)                          # reference-side gather (f32)
    ref_logits, ref_hidden = decoder_ref(emb, hidden, w_ih, w_hh, b_ih, b_hh, w_fc, b_fc)
    # Tolerance relaxed vs. the f32 reference because the MXU operands are bf16.
    np.testing.assert_allclose(np.asarray(logits), np.asarray(ref_logits), atol=3e-2, rtol=3e-2)
    np.testing.assert_allclose(np.asarray(new_hidden), np.asarray(ref_hidden), atol=3e-2, rtol=3e-2)

    print("KERNEL_OK")
</pallas_src>

<mosaic_0001>
module attributes {stable_mosaic.version = 11 : i64} {
  func.func @decoder_kernel(%arg0: memref<4x1xi32, #tpu.memory_space<vmem>>, %arg1: memref<2x4x32xf32, #tpu.memory_space<vmem>>, %arg2: memref<192x128xbf16, #tpu.memory_space<vmem>>, %arg3: memref<3x1x128xf32, #tpu.memory_space<vmem>>, %arg4: memref<2x4x128xf32, #tpu.memory_space<vmem>>) attributes {dimension_semantics = [], scalar_prefetch = 0 : i64, scratch_operands = 0 : i64, tpu.core_type = #tpu.core_type<tc>} {
    %c0 = arith.constant 0 : index
    %c0_0 = arith.constant 0 : index
    %0 = vector.load %arg0[%c0, %c0_0] : memref<4x1xi32, #tpu.memory_space<vmem>>, vector<4x1xi32>
    %1 = tpu.iota {dimensions = array<i32: 1>} : vector<4x32xi32>
    %2 = vector.broadcast %0 : vector<4x1xi32> to vector<4x32xi32>
    %3 = arith.cmpi eq, %1, %2 : vector<4x32xi32>
    %4 = arith.extui %3 : vector<4x32xi1> to vector<4x32xi32>
    %5 = arith.sitofp %4 : vector<4x32xi32> to vector<4x32xf32>
    %6 = arith.truncf %5 : vector<4x32xf32> to vector<4x32xbf16>
    %c160 = arith.constant 160 : index
    %c0_1 = arith.constant 0 : index
    %7 = vector.load %arg2[%c160, %c0_1] : memref<192x128xbf16, #tpu.memory_space<vmem>>, vector<32x128xbf16>
    %cst = arith.constant dense<0.000000e+00> : vector<4x128xf32>
    %8 = tpu.matmul %6, %7, %cst {dimension_numbers = #tpu.dot_dimension_numbers<[1], [0], [0], [1], [0, 0, 1, 1], [], []>} : vector<4x32xbf16>, vector<32x128xbf16>, vector<4x128xf32> -> vector<4x128xf32>
    %9 = vector.extract_strided_slice %8 {offsets = [0, 0], sizes = [4, 32], strides = [1, 1]} : vector<4x128xf32> to vector<4x32xf32>
    %c0_2 = arith.constant 0 : index
    %c0_3 = arith.constant 0 : index
    %c0_4 = arith.constant 0 : index
    %10 = vector.load %arg1[%c0_2, %c0_3, %c0_4] : memref<2x4x32xf32, #tpu.memory_space<vmem>>, vector<1x4x32xf32>
    %11 = vector.shape_cast %10 : vector<1x4x32xf32> to vector<4x32xf32>
    %12 = tpu.concatenate %9, %11 in 1 : vector<4x32xf32>, vector<4x32xf32> -> vector<4x64xf32>
    %13 = arith.truncf %12 : vector<4x64xf32> to vector<4x64xbf16>
    %c0_5 = arith.constant 0 : index
    %c0_6 = arith.constant 0 : index
    %14 = vector.load %arg2[%c0_5, %c0_6] : memref<192x128xbf16, #tpu.memory_space<vmem>>, vector<64x128xbf16>
    %cst_7 = arith.constant dense<0.000000e+00> : vector<4x128xf32>
    %15 = tpu.matmul %13, %14, %cst_7 {dimension_numbers = #tpu.dot_dimension_numbers<[1], [0], [0], [1], [0, 0, 1, 1], [], []>} : vector<4x64xbf16>, vector<64x128xbf16>, vector<4x128xf32> -> vector<4x128xf32>
    %c0_8 = arith.constant 0 : index
    %c0_9 = arith.constant 0 : index
    %c0_10 = arith.constant 0 : index
    %16 = vector.load %arg3[%c0_8, %c0_9, %c0_10] : memref<3x1x128xf32, #tpu.memory_space<vmem>>, vector<1x1x128xf32>
    %17 = vector.shape_cast %16 : vector<1x1x128xf32> to vector<1x128xf32>
    %18 = vector.broadcast %17 : vector<1x128xf32> to vector<4x128xf32>
    %19 = arith.addf %15, %18 : vector<4x128xf32>
    %20 = vector.extract_strided_slice %19 {offsets = [0, 0], sizes = [4, 32], strides = [1, 1]} : vector<4x128xf32> to vector<4x32xf32>
    %21 = arith.negf %20 : vector<4x32xf32>
    %22 = math.exp %21 : vector<4x32xf32>
    %cst_11 = arith.constant 1.000000e+00 : f32
    %23 = vector.broadcast %cst_11 : f32 to vector<4x32xf32>
    %24 = arith.addf %23, %22 : vector<4x32xf32>
    %25 = arith.divf %23, %24 : vector<4x32xf32>
    %26 = vector.extract_strided_slice %19 {offsets = [0, 32], sizes = [4, 32], strides = [1, 1]} : vector<4x128xf32> to vector<4x32xf32>
    %27 = arith.negf %26 : vector<4x32xf32>
    %28 = math.exp %27 : vector<4x32xf32>
    %cst_12 = arith.constant 1.000000e+00 : f32
    %29 = vector.broadcast %cst_12 : f32 to vector<4x32xf32>
    %30 = arith.addf %29, %28 : vector<4x32xf32>
    %31 = arith.divf %29, %30 : vector<4x32xf32>
    %32 = vector.extract_strided_slice %19 {offsets = [0, 64], sizes = [4, 32], strides = [1, 1]} : vector<4x128xf32> to vector<4x32xf32>
    %33 = vector.extract_strided_slice %19 {offsets = [0, 96], sizes = [4, 32], strides = [1, 1]} : vector<4x128xf32> to vector<4x32xf32>
    %34 = arith.mulf %25, %33 : vector<4x32xf32>
    %35 = arith.addf %32, %34 : vector<4x32xf32>
    %36 = math.tanh %35 : vector<4x32xf32>
    %cst_13 = arith.constant 1.000000e+00 : f32
    %37 = vector.broadcast %cst_13 : f32 to vector<4x32xf32>
    %38 = arith.subf %37, %31 : vector<4x32xf32>
    %39 = arith.mulf %38, %36 : vector<4x32xf32>
    %40 = arith.mulf %31, %11 : vector<4x32xf32>
    %41 = arith.addf %39, %40 : vector<4x32xf32>
    %c1 = arith.constant 1 : index
    %c0_14 = arith.constant 0 : index
    %c0_15 = arith.constant 0 : index
    %42 = vector.load %arg1[%c1, %c0_14, %c0_15] : memref<2x4x32xf32, #tpu.memory_space<vmem>>, vector<1x4x32xf32>
    %43 = vector.shape_cast %42 : vector<1x4x32xf32> to vector<4x32xf32>
    %44 = tpu.concatenate %41, %43 in 1 : vector<4x32xf32>, vector<4x32xf32> -> vector<4x64xf32>
    %45 = arith.truncf %44 : vector<4x64xf32> to vector<4x64xbf16>
    %c64 = arith.constant 64 : index
    %c0_16 = arith.constant 0 : index
    %46 = vector.load %arg2[%c64, %c0_16] : memref<192x128xbf16, #tpu.memory_space<vmem>>, vector<64x128xbf16>
    %cst_17 = arith.constant dense<0.000000e+00> : vector<4x128xf32>
    %47 = tpu.matmul %45, %46, %cst_17 {dimension_numbers = #tpu.dot_dimension_numbers<[1], [0], [0], [1], [0, 0, 1, 1], [], []>} : vector<4x64xbf16>, vector<64x128xbf16>, vector<4x128xf32> -> vector<4x128xf32>
    %c1_18 = arith.constant 1 : index
    %c0_19 = arith.constant 0 : index
    %c0_20 = arith.constant 0 : index
    %48 = vector.load %arg3[%c1_18, %c0_19, %c0_20] : memref<3x1x128xf32, #tpu.memory_space<vmem>>, vector<1x1x128xf32>
    %49 = vector.shape_cast %48 : vector<1x1x128xf32> to vector<1x128xf32>
    %50 = vector.broadcast %49 : vector<1x128xf32> to vector<4x128xf32>
    %51 = arith.addf %47, %50 : vector<4x128xf32>
    %52 = vector.extract_strided_slice %51 {offsets = [0, 0], sizes = [4, 32], strides = [1, 1]} : vector<4x128xf32> to vector<4x32xf32>
    %53 = arith.negf %52 : vector<4x32xf32>
    %54 = math.exp %53 : vector<4x32xf32>
    %cst_21 = arith.constant 1.000000e+00 : f32
    %55 = vector.broadcast %cst_21 : f32 to vector<4x32xf32>
    %56 = arith.addf %55, %54 : vector<4x32xf32>
    %57 = arith.divf %55, %56 : vector<4x32xf32>
    %58 = vector.extract_strided_slice %51 {offsets = [0, 32], sizes = [4, 32], strides = [1, 1]} : vector<4x128xf32> to vector<4x32xf32>
    %59 = arith.negf %58 : vector<4x32xf32>
    %60 = math.exp %59 : vector<4x32xf32>
    %cst_22 = arith.constant 1.000000e+00 : f32
    %61 = vector.broadcast %cst_22 : f32 to vector<4x32xf32>
    %62 = arith.addf %61, %60 : vector<4x32xf32>
    %63 = arith.divf %61, %62 : vector<4x32xf32>
    %64 = vector.extract_strided_slice %51 {offsets = [0, 64], sizes = [4, 32], strides = [1, 1]} : vector<4x128xf32> to vector<4x32xf32>
    %65 = vector.extract_strided_slice %51 {offsets = [0, 96], sizes = [4, 32], strides = [1, 1]} : vector<4x128xf32> to vector<4x32xf32>
    %66 = arith.mulf %57, %65 : vector<4x32xf32>
    %67 = arith.addf %64, %66 : vector<4x32xf32>
    %68 = math.tanh %67 : vector<4x32xf32>
    %cst_23 = arith.constant 1.000000e+00 : f32
    %69 = vector.broadcast %cst_23 : f32 to vector<4x32xf32>
    %70 = arith.subf %69, %63 : vector<4x32xf32>
    %71 = arith.mulf %70, %68 : vector<4x32xf32>
    %72 = arith.mulf %63, %43 : vector<4x32xf32>
    %73 = arith.addf %71, %72 : vector<4x32xf32>
    %74 = arith.truncf %73 : vector<4x32xf32> to vector<4x32xbf16>
    %c128 = arith.constant 128 : index
    %c0_24 = arith.constant 0 : index
    %75 = vector.load %arg2[%c128, %c0_24] : memref<192x128xbf16, #tpu.memory_space<vmem>>, vector<32x128xbf16>
    %cst_25 = arith.constant dense<0.000000e+00> : vector<4x128xf32>
    %76 = tpu.matmul %74, %75, %cst_25 {dimension_numbers = #tpu.dot_dimension_numbers<[1], [0], [0], [1], [0, 0, 1, 1], [], []>} : vector<4x32xbf16>, vector<32x128xbf16>, vector<4x128xf32> -> vector<4x128xf32>
    %c2 = arith.constant 2 : index
    %c0_26 = arith.constant 0 : index
    %c0_27 = arith.constant 0 : index
    %77 = vector.load %arg3[%c2, %c0_26, %c0_27] : memref<3x1x128xf32, #tpu.memory_space<vmem>>, vector<1x1x128xf32>
    %78 = vector.shape_cast %77 : vector<1x1x128xf32> to vector<1x128xf32>
    %79 = vector.broadcast %78 : vector<1x128xf32> to vector<4x128xf32>
    %80 = arith.addf %76, %79 : vector<4x128xf32>
    %c0_28 = arith.constant 0 : index
    %c0_29 = arith.constant 0 : index
    %c0_30 = arith.constant 0 : index
    %81 = vector.load %arg4[%c0_28, %c0_29, %c0_30] : memref<2x4x128xf32, #tpu.memory_space<vmem>>, vector<1x4x128xf32>
    %82 = vector.shape_cast %81 : vector<1x4x128xf32> to vector<4x128xf32>
    %83 = vector.shape_cast %80 : vector<4x128xf32> to vector<1x4x128xf32>
    tpu.vector_store %arg4[%c0_28, %c0_29, %c0_30], %83 {strides = array<i32>} : memref<2x4x128xf32, #tpu.memory_space<vmem>>, vector<1x4x128xf32>,
    %cst_31 = arith.constant 0.000000e+00 : f32
    %84 = vector.broadcast %cst_31 : f32 to vector<4x64xf32>
    %85 = tpu.concatenate %41, %73, %84 in 1 : vector<4x32xf32>, vector<4x32xf32>, vector<4x64xf32> -> vector<4x128xf32>
    %c1_32 = arith.constant 1 : index
    %c0_33 = arith.constant 0 : index
    %c0_34 = arith.constant 0 : index
    %86 = vector.load %arg4[%c1_32, %c0_33, %c0_34] : memref<2x4x128xf32, #tpu.memory_space<vmem>>, vector<1x4x128xf32>
    %87 = vector.shape_cast %86 : vector<1x4x128xf32> to vector<4x128xf32>
    %88 = vector.shape_cast %85 : vector<4x128xf32> to vector<1x4x128xf32>
    tpu.vector_store %arg4[%c1_32, %c0_33, %c0_34], %88 {strides = array<i32>} : memref<2x4x128xf32, #tpu.memory_space<vmem>>, vector<1x4x128xf32>,
    return
  }
}

</mosaic_0001>

<llo_original>
// kernel: squeeze.3
$region0: #{squeeze.3}
  %s0 = inlined_call_operand.vmem [shape: f32[1,4,64], index: 0, kind: input, shape index: {}]
  %s1 = inlined_call_operand.vmem [shape: f32[4,2,32], index: 1, kind: output, shape index: {}]
  $region1: #{squeeze.3} parent=0
    #allocation0 [shape = 'u8[16384]{0}', space=vmem, size = 0x4000, scoped, tag = 'scoped mem for output reshape']
    #allocation1 [shape = 'u8[4096]{0}', space=vmem, size = 0x1000, scoped, tag = 'scoped mem for input reshape']
    %s3 = sshll.u32 1, 4
    %s4 = ssub.s32 %s3, 1
    %v5 = vld [vmem:[%s0] sm:%s4]
    %6 = vst [vmem:[#allocation1] sm:%s4] %v5
    %v7 = vld [vmem:[#allocation1] sm:$0xf]
    %vm8 = vcmask 261120
    %9 = vst.msk [vmem:[#allocation0] ss:$8 sm:$0xf] %vm8, %v7
    %v10 = vld [vmem:[#allocation1] sm:$0xf]
    %11 = vrot.lane.b32.xlu0 %v10, 96
    %v12 = vpop.permute.xlu0 %11
    %vm13 = vcmask 261120
    %s14 = scalar_lea.vmem [#allocation0], 1
    %15 = vst.msk [vmem:[%s14] ss:$8 sm:$0xf] %vm13, %v12
    %s17 = sshll.u32 1, 2
    %s18 = ssub.s32 %s17, 1
    %v20 = vld [vmem:[#allocation0] sm:%s18]
    %s21 = sshll.u32 1, 2
    %s22 = ssub.s32 %s21, 1
    %23 = vst [vmem:[%s1] sm:%s22] %v20
    %s24 = scalar_lea.vmem [#allocation0], 8
    %v25 = vld [vmem:[%s24] sm:%s18]
    %s26 = sshll.u32 1, 2
    %s27 = ssub.s32 %s26, 1
    %s28 = scalar_lea.vmem %s1, 2
    %29 = vst [vmem:[%s28] sm:%s27] %v25
    %s30 = scalar_lea.vmem [#allocation0], 16
    %v31 = vld [vmem:[%s30] sm:%s18]
    %s32 = sshll.u32 1, 2
    %s33 = ssub.s32 %s32, 1
    %s34 = smul.addr 2, 2
    %s35 = scalar_lea.vmem %s1, %s34
    %36 = vst [vmem:[%s35] sm:%s33] %v31
    %s37 = scalar_lea.vmem [#allocation0], 24
    %v38 = vld [vmem:[%s37] sm:%s18]
    %s39 = sshll.u32 1, 2
    %s40 = ssub.s32 %s39, 1
    %s41 = smul.addr 2, 3
    %s42 = scalar_lea.vmem %s1, %s41
    %43 = vst [vmem:[%s42] sm:%s40] %v38

// kernel: decoder_step.1
$region0: #{decoder_step.1}
  #allocation0 [shape = 'u32[]', space=smem, size = 0x4, offset = 0x4, fixed_abs, tag = 'smem constant byte address 0x4 - core index']
  #allocation1 [shape = 'u32[144,128]{1,0:T(1,128)}', space=vmem, size = 0x12000, scoped, tag = 'internal scratch']
  %s0 = inlined_call_operand.vmem [shape: s32[4,1], index: 0, kind: input, shape index: {}]
  %s1 = inlined_call_operand.vmem [shape: f32[2,4,32], index: 1, kind: input, shape index: {}]
  %s2 = inlined_call_operand.hbm [shape: bf16[192,128], index: 2, kind: input, shape index: {}]
  %s3 = inlined_call_operand.vmem [shape: f32[3,1,128], index: 3, kind: input, shape index: {}]
  %s4 = inlined_call_operand.vmem [shape: f32[2,4,128], index: 4, kind: output, shape index: {}]
  %s5 = sld [smem:[#allocation0]]
  $region30: #{decoder_step.1} parent=0
    _
  %s7 = ssub.s32 1, %s5
  %s8 = scalar_select 0, %s7, %s5
  $region1: #{decoder_step.1} parent=0
    #allocation2 [shape = 'u8[49152]{0}', space=vmem, size = 0xc000, scoped, tag = 'input window, operand 2, single buffered']
    #allocation3 [shape = 's32[1]{0}', space=sflag, size = 0x4, scoped, tag = 'scoped memory for decoder_step.1']
    %9 = vsyncpa [#allocation3], 0
    // Predicated region
    $region2: #{decoder_step.1} parent=1 // pred_check
      _
    $region3: #{decoder_step.1} parent=1 // pred_check_branch
      %11 = sbr.rel (0) target = $region5
    $region4: #{decoder_step.1} parent=1 // pred_region
      _
    $region5: #{decoder_step.1} parent=1 // pred_fallthru
      _
    // Predicated region
    $region6: #{decoder_step.1} parent=1 // pred_check
      _
    $region7: #{decoder_step.1} parent=1 // pred_check_branch
      %13 = sbr.rel (0) target = $region9
    $region8: #{decoder_step.1} parent=1 // pred_region
      _
    $region9: #{decoder_step.1} parent=1 // pred_fallthru
      _
    // Predicated region
    $region10: #{decoder_step.1} parent=1 // pred_check
      _
    $region11: #{decoder_step.1} parent=1 // pred_check_branch
      %15 = sbr.rel (0) target = $region13
    $region12: #{decoder_step.1} parent=1 // pred_region
      %s17 = ssub.s32 1536, 1536
      %18 = vsyncadd [#allocation3], %s17
      %s19 = sshll.u32 [#allocation2], 4
      %s20 = int_to_ptr.vmem [resolvable:$true] %s19
      %25 = dma.hbm_to_vmem [thread:$0]  %s2, 1536, %s20, [#allocation3], 64, 64, 4
    $region13: #{decoder_step.1} parent=1 // pred_fallthru
      _
    // Predicated region
    $region14: #{decoder_step.1} parent=1 // pred_check
      _
    $region15: #{decoder_step.1} parent=1 // pred_check_branch
      %27 = sbr.rel (0) target = $region17
    $region16: #{decoder_step.1} parent=1 // pred_region
      _
    $region17: #{decoder_step.1} parent=1 // pred_fallthru
      _
    // Predicated region
    $region18: #{decoder_step.1} parent=1 // pred_check
      _
    $region19: #{decoder_step.1} parent=1 // pred_check_branch
      %29 = sbr.rel (0) target = $region21
    $region20: #{decoder_step.1} parent=1 // pred_region
      %30 = dma.done [#allocation3], 1536
    $region21: #{decoder_step.1} parent=1 // pred_fallthru
      _
    %v32 = vld [vmem:[%s0] sm:$0xf]
    %v33 = vlaneseq
    %v34 = vand.u32 %v33, 127
    %35 = vset.pattern.permute.xlu0 0
    %36 = vperm.xlu0 %35, %v32
    %v37 = vpop.permute.xlu0 %36
    %vm38 = vcmp.eq.s32.totalorder %v34, %v37
    %v39 = vsel %vm38, 1, 0
    %v40 = vcvt.s32.f32 %v39
    %v41 = vpack.c.bf16 %v40, %v40
    %v42 = vld [vmem:[#allocation2 + $0x50] sm:$0xf]
    %v43 = vld [vmem:[#allocation2 + $0x54] sm:$0xf]
    %v44 = vld [vmem:[#allocation2 + $0x58] sm:$0xf]
    %v45 = vld [vmem:[#allocation2 + $0x5c] sm:$0xf]
    %v50 = vunpack.c.l.b16 %v42
    %v51 = vunpack.c.l.b16 %v43
    %v52 = vunpack.c.l.b16 %v44
    %v53 = vunpack.c.l.b16 %v45
    %v54 = vpack.c.b16 %v51, %v50
    %v55 = vpack.c.b16 %v53, %v52
    %vm58 = vcmask 261120
    %v60 = vsel %vm58, %v41, 0
    %62 = vmatprep.subr.bf16.mxu0 0
    %63 = vmatpush1.bf16.msra.mxu0 0
    %64 = vmatprep.subr.bf16.mxu0 0
    %65 = vmatpush1.bf16.msra.mxu0 0
    %66 = vmatprep.subr.bf16.mxu0 0
    %67 = vmatpush1.bf16.msra.mxu0 0
    %68 = vmatprep.subr.bf16.mxu0 0
    %69 = vmatpush1.bf16.msra.mxu0 0
    %70 = vmatprep.subr.bf16.mxu0 0
    %71 = vmatpush1.bf16.msra.mxu0 0
    %72 = vmatprep.subr.bf16.mxu0 0
    %73 = vmatpush1.bf16.msra.mxu0 0
    %74 = vmatprep.subr.bf16.mxu0 0
    %75 = vmatpush1.bf16.msra.mxu0 %v55
    %76 = vmatprep.subr.bf16.mxu0 0
    %77 = vmatpush1.bf16.msra.mxu0 %v54
    %78 = vmatprep.subr.bf16.mxu0 0
    %79 = vmatpush2.bf16.msra.mxu0 0
    %80 = vmatprep.subr.bf16.mxu0 0
    %81 = vmatpush2.bf16.msra.mxu0 0
    %82 = vmatprep.subr.bf16.mxu0 0
    %83 = vmatpush2.bf16.msra.mxu0 0
    %84 = vmatprep.subr.bf16.mxu0 0
    %85 = vmatpush2.bf16.msra.mxu0 0
    %86 = vmatprep.subr.bf16.mxu0 0
    %87 = vmatpush2.bf16.msra.mxu0 0
    %88 = vmatprep.subr.bf16.mxu0 0
    %89 = vmatpush2.bf16.msra.mxu0 0
    %90 = vmatprep.subr.bf16.mxu0 0
    %91 = vmatpush2.bf16.msra.mxu0 0
    %92 = vmatprep.subr.bf16.mxu0 0
    %93 = vmatpush2.bf16.msra.mxu0 0
    %94 = vmatprep.mubr.bf16.mxu0 0
    %95 = vmatmul.mubr.bf16.gmra.mxu0 %v60
    %v96 = vpop.f32.mrf.mxu0
    %v97 = vadd.f32 0.0, %v96
    %v98 = vpop.f32.mrf.mxu0
    %v99 = vpop.f32.mrf.mxu0
    %v100 = vpop.f32.mrf.mxu0
    %101 = vdwg.mxu0
    %v102 = vld [vmem:[%s1] sm:$0xf]
    %104 = vrot.lane.b32.xlu0 %v102, 32
    %v105 = vpop.permute.xlu0 %104
    %v107 = vsel %vm58, %v97, %v105
    %v108 = vpack.c.bf16 %v107, %v107
    %v109 = vld [vmem:[#allocation2] sm:$0xf]
    %v110 = vld [vmem:[#allocation2 + $0x4] sm:$0xf]
    %v111 = vld [vmem:[#allocation2 + $0x8] sm:$0xf]
    %v112 = vld [vmem:[#allocation2 + $0xc] sm:$0xf]
    %v113 = vld [vmem:[#allocation2 + $0x10] sm:$0xf]
    %v114 = vld [vmem:[#allocation2 + $0x14] sm:$0xf]
    %v115 = vld [vmem:[#allocation2 + $0x18] sm:$0xf]
    %v116 = vld [vmem:[#allocation2 + $0x1c] sm:$0xf]
    %v117 = vld [vmem:[%s3] sm:$0x1]
    %v119 = vlaneseq
    %v120 = vshrl.u32 %v119, 7
    %v121 = vsub.s32 0, %v120
    %v122 = vrot.slane %v117, %v121
    %v132 = vunpack.c.l.b16 %v109
    %v133 = vunpack.c.l.b16 %v110
    %v134 = vunpack.c.l.b16 %v111
    %v135 = vunpack.c.l.b16 %v112
    %v136 = vunpack.c.l.b16 %v113
    %v137 = vunpack.c.l.b16 %v114
    %v138 = vunpack.c.l.b16 %v115
    %v139 = vunpack.c.l.b16 %v116
    %v140 = vpack.c.b16 %v133, %v132
    %v141 = vpack.c.b16 %v135, %v134
    %v142 = vpack.c.b16 %v137, %v136
    %v143 = vpack.c.b16 %v139, %v138
    %vm148 = vcmask 523264
    %v150 = vsel %vm148, %v108, 0
    %152 = vmatprep.subr.bf16.mxu0 0
    %153 = vmatpush1.bf16.msra.mxu0 0
    %154 = vmatprep.subr.bf16.mxu0 0
    %155 = vmatpush1.bf16.msra.mxu0 0
    %156 = vmatprep.subr.bf16.mxu0 0
    %157 = vmatpush1.bf16.msra.mxu0 0
    %158 = vmatprep.subr.bf16.mxu0 0
    %159 = vmatpush1.bf16.msra.mxu0 0
    %160 = vmatprep.subr.bf16.mxu0 0
    %161 = vmatpush1.bf16.msra.mxu0 %v143
    %162 = vmatprep.subr.bf16.mxu0 0
    %163 = vmatpush1.bf16.msra.mxu0 %v142
    %164 = vmatprep.subr.bf16.mxu0 0
    %165 = vmatpush1.bf16.msra.mxu0 %v141
    %166 = vmatprep.subr.bf16.mxu0 0
    %167 = vmatpush1.bf16.msra.mxu0 %v140
    %168 = vmatprep.subr.bf16.mxu0 0
    %169 = vmatpush2.bf16.msra.mxu0 0
    %170 = vmatprep.subr.bf16.mxu0 0
    %171 = vmatpush2.bf16.msra.mxu0 0
    %172 = vmatprep.subr.bf16.mxu0 0
    %173 = vmatpush2.bf16.msra.mxu0 0
    %174 = vmatprep.subr.bf16.mxu0 0
    %175 = vmatpush2.bf16.msra.mxu0 0
    %176 = vmatprep.subr.bf16.mxu0 0
    %177 = vmatpush2.bf16.msra.mxu0 0
    %178 = vmatprep.subr.bf16.mxu0 0
    %179 = vmatpush2.bf16.msra.mxu0 0
    %180 = vmatprep.subr.bf16.mxu0 0
    %181 = vmatpush2.bf16.msra.mxu0 0
    %182 = vmatprep.subr.bf16.mxu0 0
    %183 = vmatpush2.bf16.msra.mxu0 0
    %184 = vmatprep.mubr.bf16.mxu0 0
    %185 = vmatmul.mubr.bf16.gmra.mxu0 %v150
    %v186 = vpop.f32.mrf.mxu0
    %v187 = vadd.f32 %v122, %v186
    %v188 = vpop.f32.mrf.mxu0
    %v189 = vpop.f32.mrf.mxu0
    %v190 = vpop.f32.mrf.mxu0
    %191 = vdwg.mxu0
    %v192 = vxor.u32 %v187, 2147483648
    %v193 = vmul.f32 %v192, 1.442695
    %v194 = vpow.pop %v193
    %v195 = vadd.f32 %v194, 1.0
    %v196 = vrcp.pop %v195
    %v197 = vmul.f32 1.0, %v196
    %199 = vrot.lane.b32.xlu0 %v187, 32
    %v200 = vpop.permute.xlu0 %199
    %v202 = vmul.f32 %v197, %v200
    %204 = vrot.lane.b32.xlu0 %v202, 64
    %v205 = vpop.permute.xlu0 %204
    %v207 = vadd.f32 %v187, %v205
    %v208 = vtanh.pop %v207
    %v209 = vsub.f32 1.0, %v197
    %211 = vrot.lane.b32.xlu0 %v208, 96
    %v212 = vpop.permute.xlu0 %211
    %v214 = vmul.f32 %v209, %v212
    %v215 = vmul.f32 %v197, %v105
    %v216 = vadd.f32 %v214, %v215
    %s217 = scalar_lea.vmem %s1, 4
    %v218 = vld [vmem:[%s217] sm:$0xf]
    %220 = vrot.lane.b32.xlu0 %v216, 96
    %v221 = vpop.permute.xlu0 %220
    %224 = vrot.lane.b32.xlu0 %v218, 32
    %v225 = vpop.permute.xlu0 %224
    %v227 = vsel %vm58, %v221, %v225
    %v228 = vpack.c.bf16 %v227, %v227
    %v229 = vld [vmem:[#allocation2 + $0x20] sm:$0xf]
    %v230 = vld [vmem:[#allocation2 + $0x24] sm:$0xf]
    %v231 = vld [vmem:[#allocation2 + $0x28] sm:$0xf]
    %v232 = vld [vmem:[#allocation2 + $0x2c] sm:$0xf]
    %v233 = vld [vmem:[#allocation2 + $0x30] sm:$0xf]
    %v234 = vld [vmem:[#allocation2 + $0x34] sm:$0xf]
    %v235 = vld [vmem:[#allocation2 + $0x38] sm:$0xf]
    %v236 = vld [vmem:[#allocation2 + $0x3c] sm:$0xf]
    %s237 = scalar_lea.vmem %s3, 1
    %v238 = vld [vmem:[%s237] sm:$0x1]
    %v240 = vlaneseq
    %v241 = vshrl.u32 %v240, 7
    %v242 = vsub.s32 0, %v241
    %v243 = vrot.slane %v238, %v242
    %v253 = vunpack.c.l.b16 %v229
    %v254 = vunpack.c.l.b16 %v230
    %v255 = vunpack.c.l.b16 %v231
    %v256 = vunpack.c.l.b16 %v232
    %v257 = vunpack.c.l.b16 %v233
    %v258 = vunpack.c.l.b16 %v234
    %v259 = vunpack.c.l.b16 %v235
    %v260 = vunpack.c.l.b16 %v236
    %v261 = vpack.c.b16 %v254, %v253
    %v262 = vpack.c.b16 %v256, %v255
    %v263 = vpack.c.b16 %v258, %v257
    %v264 = vpack.c.b16 %v260, %v259
    %v270 = vsel %vm148, %v228, 0
    %272 = vmatprep.subr.bf16.mxu0 0
    %273 = vmatpush1.bf16.msra.mxu0 0
    %274 = vmatprep.subr.bf16.mxu0 0
    %275 = vmatpush1.bf16.msra.mxu0 0
    %276 = vmatprep.subr.bf16.mxu0 0
    %277 = vmatpush1.bf16.msra.mxu0 0
    %278 = vmatprep.subr.bf16.mxu0 0
    %279 = vmatpush1.bf16.msra.mxu0 0
    %280 = vmatprep.subr.bf16.mxu0 0
    %281 = vmatpush1.bf16.msra.mxu0 %v264
    %282 = vmatprep.subr.bf16.mxu0 0
    %283 = vmatpush1.bf16.msra.mxu0 %v263
    %284 = vmatprep.subr.bf16.mxu0 0
    %285 = vmatpush1.bf16.msra.mxu0 %v262
    %286 = vmatprep.subr.bf16.mxu0 0
    %287 = vmatpush1.bf16.msra.mxu0 %v261
    %288 = vmatprep.subr.bf16.mxu0 0
    %289 = vmatpush2.bf16.msra.mxu0 0
    %290 = vmatprep.subr.bf16.mxu0 0
    %291 = vmatpush2.bf16.msra.mxu0 0
    %292 = vmatprep.subr.bf16.mxu0 0
    %293 = vmatpush2.bf16.msra.mxu0 0
    %294 = vmatprep.subr.bf16.mxu0 0
    %295 = vmatpush2.bf16.msra.mxu0 0
    %296 = vmatprep.subr.bf16.mxu0 0
    %297 = vmatpush2.bf16.msra.mxu0 0
    %298 = vmatprep.subr.bf16.mxu0 0
    %299 = vmatpush2.bf16.msra.mxu0 0
    %300 = vmatprep.subr.bf16.mxu0 0
    %301 = vmatpush2.bf16.msra.mxu0 0
    %302 = vmatprep.subr.bf16.mxu0 0
    %303 = vmatpush2.bf16.msra.mxu0 0
    %304 = vmatprep.mubr.bf16.mxu0 0
    %305 = vmatmul.mubr.bf16.gmra.mxu0 %v270
    %v306 = vpop.f32.mrf.mxu0
    %v307 = vadd.f32 %v243, %v306
    %v308 = vpop.f32.mrf.mxu0
    %v309 = vpop.f32.mrf.mxu0
    %v310 = vpop.f32.mrf.mxu0
    %311 = vdwg.mxu0
    %v312 = vxor.u32 %v307, 2147483648
    %v313 = vmul.f32 %v312, 1.442695
    %v314 = vpow.pop %v313
    %v315 = vadd.f32 %v314, 1.0
    %v316 = vrcp.pop %v315
    %v317 = vmul.f32 1.0, %v316
    %319 = vrot.lane.b32.xlu0 %v307, 32
    %v320 = vpop.permute.xlu0 %319
    %v322 = vmul.f32 %v317, %v320
    %324 = vrot.lane.b32.xlu0 %v322, 64
    %v325 = vpop.permute.xlu0 %324
    %v327 = vadd.f32 %v307, %v325
    %v328 = vtanh.pop %v327
    %v329 = vsub.f32 1.0, %v317
    %331 = vrot.lane.b32.xlu0 %v328, 96
    %v332 = vpop.permute.xlu0 %331
    %v334 = vmul.f32 %v329, %v332
    %v335 = vmul.f32 %v317, %v225
    %v336 = vadd.f32 %v334, %v335
    %v337 = vpack.c.bf16 %v336, %v336
    %v338 = vld [vmem:[#allocation2 + $0x40] sm:$0xf]
    %v339 = vld [vmem:[#allocation2 + $0x44] sm:$0xf]
    %v340 = vld [vmem:[#allocation2 + $0x48] sm:$0xf]
    %v341 = vld [vmem:[#allocation2 + $0x4c] sm:$0xf]
    %s342 = scalar_lea.vmem %s3, 2
    %v343 = vld [vmem:[%s342] sm:$0x1]
    %v345 = vlaneseq
    %v346 = vshrl.u32 %v345, 7
    %v347 = vsub.s32 0, %v346
    %v348 = vrot.slane %v343, %v347
    %351 = vrot.lane.b32.xlu0 %v337, 96
    %v352 = vpop.permute.xlu0 %351
    %v357 = vunpack.c.l.b16 %v338
    %v358 = vunpack.c.l.b16 %v339
    %v359 = vunpack.c.l.b16 %v340
    %v360 = vunpack.c.l.b16 %v341
    %v361 = vpack.c.b16 %v358, %v357
    %v362 = vpack.c.b16 %v360, %v359
    %v366 = vsel %vm58, %v352, 0
    %368 = vmatprep.subr.bf16.mxu0 0
    %369 = vmatpush1.bf16.msra.mxu0 0
    %370 = vmatprep.subr.bf16.mxu0 0
    %371 = vmatpush1.bf16.msra.mxu0 0
    %372 = vmatprep.subr.bf16.mxu0 0
    %373 = vmatpush1.bf16.msra.mxu0 0
    %374 = vmatprep.subr.bf16.mxu0 0
    %375 = vmatpush1.bf16.msra.mxu0 0
    %376 = vmatprep.subr.bf16.mxu0 0
    %377 = vmatpush1.bf16.msra.mxu0 0
    %378 = vmatprep.subr.bf16.mxu0 0
    %379 = vmatpush1.bf16.msra.mxu0 0
    %380 = vmatprep.subr.bf16.mxu0 0
    %381 = vmatpush1.bf16.msra.mxu0 %v362
    %382 = vmatprep.subr.bf16.mxu0 0
    %383 = vmatpush1.bf16.msra.mxu0 %v361
    %384 = vmatprep.subr.bf16.mxu0 0
    %385 = vmatpush2.bf16.msra.mxu0 0
    %386 = vmatprep.subr.bf16.mxu0 0
    %387 = vmatpush2.bf16.msra.mxu0 0
    %388 = vmatprep.subr.bf16.mxu0 0
    %389 = vmatpush2.bf16.msra.mxu0 0
    %390 = vmatprep.subr.bf16.mxu0 0
    %391 = vmatpush2.bf16.msra.mxu0 0
    %392 = vmatprep.subr.bf16.mxu0 0
    %393 = vmatpush2.bf16.msra.mxu0 0
    %394 = vmatprep.subr.bf16.mxu0 0
    %395 = vmatpush2.bf16.msra.mxu0 0
    %396 = vmatprep.subr.bf16.mxu0 0
    %397 = vmatpush2.bf16.msra.mxu0 0
    %398 = vmatprep.subr.bf16.mxu0 0
    %399 = vmatpush2.bf16.msra.mxu0 0
    %400 = vmatprep.mubr.bf16.mxu0 0
    %401 = vmatmul.mubr.bf16.gmra.mxu0 %v366
    %v402 = vpop.f32.mrf.mxu0
    %v403 = vadd.f32 %v348, %v402
    %v404 = vpop.f32.mrf.mxu0
    %v405 = vpop.f32.mrf.mxu0
    %v406 = vpop.f32.mrf.mxu0
    %407 = vdwg.mxu0
    %408 = vst [vmem:[%s4] sm:$0xf] %v403
    %v409 = vsel %vm58, %v221, %v336
    %v410 = vsel %vm148, %v409, 0.0
    %s411 = scalar_lea.vmem %s4, 4
    %412 = vst [vmem:[%s411] sm:$0xf] %v410
    // Predicated region
    $region22: #{decoder_step.1} parent=1 // pred_check
      _
    $region23: #{decoder_step.1} parent=1 // pred_check_branch
      %414 = sbr.rel (0) target = $region25
    $region24: #{decoder_step.1} parent=1 // pred_region
      _
    $region25: #{decoder_step.1} parent=1 // pred_fallthru
      _
    // Predicated region
    $region26: #{decoder_step.1} parent=1 // pred_check
      _
    $region27: #{decoder_step.1} parent=1 // pred_check_branch
      %416 = sbr.rel (0) target = $region29
    $region28: #{decoder_step.1} parent=1 // pred_region
      _
    $region29: #{decoder_step.1} parent=1 // pred_fallthru
      _
    %417 = vsyncpa [#allocation3], 1

</llo_original>
